<compile_context>
chip_gen: v6e
topology: v6e:2x2x1
jax: 0.10.0
libtpu: 0.0.40
codegen_flags: <defaults>
</compile_context>

<pallas_src>
import math

import jax
import jax.numpy as jnp
from jax.experimental import pallas as pl
from jax.experimental.pallas import tpu as pltpu

LANE = 128   # vreg lane width
SUB = 8      # vreg sublane count


def _round_up(x, m):
    return ((x + m - 1) // m) * m


def _sparse_reward_kernel(goal_ref, params_ref, pos_ref, out_ref):
    """One grid step over a lane-dense slab of flattened points.

    goal_ref:   (D,) f32 SMEM        - goal position, read as scalars
    params_ref: (2,) f32 SMEM        - [weight, -1/(2*sigma**2)]
    pos_ref:    (D, TR, 128) VMEM    - coordinate-planar positions (f32/bf16)
    out_ref:    (TR, 128) f32 VMEM   - cost slab (lane-dense, unmasked vst)
    """
    weight = params_ref[0]
    neg_coef = params_ref[1]          # == -1 / (2 * sigma**2)

    ncoord = pos_ref.shape[0]         # static (e.g. 3) -> unrolled at trace time
    diff = pos_ref[0].astype(jnp.float32) - goal_ref[0]
    dist_sq = diff * diff
    for d in range(1, ncoord):
        diff = pos_ref[d].astype(jnp.float32) - goal_ref[d]
        dist_sq = dist_sq + diff * diff

    # Single VPU vmul for the scale; exp goes to the EUP (separate VLIW slot).
    out_ref[...] = weight * (1.0 - jnp.exp(dist_sq * neg_coef))


def cart_sparse_reward_planar(pos_planar, ee_goal_pos, *, weight, sigma,
                              block_rows=4096):
    """Pallas path over coordinate-planar (struct-of-arrays) positions.

    pos_planar: (D, R, 128) or (D, N) with N % 128 == 0; dtype f32 or bf16.
                Lanes beyond the valid point count may hold arbitrary values.
    Returns the f32 cost for all R*128 lanes, flattened; the caller slices to
    the valid point count.
    """
    pos_planar = jnp.asarray(pos_planar)
    if pos_planar.dtype != jnp.bfloat16:
        pos_planar = pos_planar.astype(jnp.float32)
    if pos_planar.ndim == 2:
        d2, n2 = pos_planar.shape
        if n2 % LANE != 0:
            raise ValueError("(D, N) planar input needs N % 128 == 0; "
                             "pass a (D, R, 128) array instead")
        pos_planar = pos_planar.reshape(d2, n2 // LANE, LANE)
    if pos_planar.ndim != 3 or pos_planar.shape[-1] != LANE:
        raise ValueError(f"expected (D, R, {LANE}) planar layout, got "
                         f"{pos_planar.shape}")
    D, R, _ = pos_planar.shape

    goal = jnp.asarray(ee_goal_pos, jnp.float32).reshape(-1)
    if goal.shape != (D,):
        raise ValueError(f"goal shape {goal.shape} does not match D={D}")

    # Traced (2,) SMEM scalars: weight / sigma may vary at runtime under jit
    # without recompilation or constant re-baking.
    w = jnp.asarray(weight, jnp.float32).reshape(())
    neg_coef = -0.5 / (jnp.asarray(sigma, jnp.float32).reshape(()) ** 2)
    params = jnp.stack([w, neg_coef])

    # Tile choice: as large as VMEM comfortably allows (amortizes ~0.35us/step
    # pipeline overhead), but always >= 2 grid steps once there is enough work
    # so the "parallel" axis can be split across v7x's two TensorCores.
    block_rows = max(SUB, (int(block_rows) // SUB) * SUB)
    if R >= 2 * SUB:
        tile_r = min(block_rows, _round_up((R + 1) // 2, SUB))
    else:
        tile_r = R                      # single block == full row extent
    grid = (pl.cdiv(R, tile_r),)        # partial boundary block: garbage reads
                                        # allowed, out-of-bounds writes dropped

    out = pl.pallas_call(
        _sparse_reward_kernel,
        out_shape=jax.ShapeDtypeStruct((R, LANE), jnp.float32),
        grid=grid,
        in_specs=[
            pl.BlockSpec(memory_space=pltpu.MemorySpace.SMEM),      # goal (D,)
            pl.BlockSpec(memory_space=pltpu.MemorySpace.SMEM),      # params (2,)
            pl.BlockSpec((D, tile_r, LANE), lambda i: (0, i, 0)),   # positions
        ],
        out_specs=pl.BlockSpec((tile_r, LANE), lambda i: (i, 0)),
        compiler_params=pltpu.CompilerParams(
            dimension_semantics=("parallel",),      # megacore-shardable
            vmem_limit_bytes=32 * 1024 * 1024,      # fits all chips incl. v7x
        ),
    )(goal, params, pos_planar)

    return out.reshape(R * LANE)


def _sparse_reward_xla(ee_pos_batch, ee_goal_pos, weight, sigma):
    """Fused 3-op XLA expression; also used as the test reference."""
    pos = jnp.asarray(ee_pos_batch).astype(jnp.float32)
    goal = jnp.asarray(ee_goal_pos, jnp.float32)
    w = jnp.asarray(weight, jnp.float32)
    neg_coef = -0.5 / (jnp.asarray(sigma, jnp.float32) ** 2)
    dist_sq = jnp.sum((pos - goal) ** 2, axis=-1)
    return w * (1.0 - jnp.exp(dist_sq * neg_coef))


def aos_to_planar(ee_pos_batch):
    """(..., D) array-of-structs -> (D, cdiv(N,128), 128) coordinate-planar.

    Costs one extra HBM read+write pass.  TODO(synk): upstream producers
    should emit this layout directly so the Pallas path hits the 16 B/point
    HBM roofline without it.
    """
    pos = jnp.asarray(ee_pos_batch)
    D = pos.shape[-1]
    flat = pos.reshape(-1, D)
    n = flat.shape[0]
    r = -(-n // LANE)
    planar = jnp.pad(flat.T, ((0, 0), (0, r * LANE - n)))
    return planar.reshape(D, r, LANE)


def cart_sparse_reward(ee_pos_batch, ee_goal_pos, *, weight, sigma,
                       block_rows=4096, small_n_threshold=64 * 1024,
                       force_pallas=False):
    """cost = weight * (1 - exp(-||ee_pos - ee_goal||^2 / (2*sigma^2))).

    ee_pos_batch: (..., D) array-of-structs, e.g. (batch, horizon, 3).
    Returns cost of shape ee_pos_batch.shape[:-1] (f32).
    """
    ee_pos_batch = jnp.asarray(ee_pos_batch)
    if ee_pos_batch.dtype != jnp.bfloat16:
        ee_pos_batch = ee_pos_batch.astype(jnp.float32)

    lead_shape = ee_pos_batch.shape[:-1]
    n = math.prod(lead_shape) if lead_shape else 1

    # Small problems: fixed pallas_call launch + DMA overhead dominates; the
    # fused XLA expression is strictly faster there.
    if n < small_n_threshold and not force_pallas:
        return _sparse_reward_xla(ee_pos_batch, ee_goal_pos, weight, sigma)

    planar = aos_to_planar(ee_pos_batch)
    cost = cart_sparse_reward_planar(planar, ee_goal_pos, weight=weight,
                                     sigma=sigma, block_rows=block_rows)
    return cost[:n].reshape(lead_shape)


if __name__ == "__main__":
    weight = 100.0
    sigma = 0.05

    key = jax.random.PRNGKey(0)
    k1, k2, k3, k4 = jax.random.split(key, 4)

    # Case 1: small (batch, horizon, 3) shape; force the Pallas path and also
    # check the default small-N fused dispatch.
    B, H, D = 2, 16, 3
    ee_pos = jax.random.normal(k1, (B, H, D), dtype=jnp.float32)
    ee_goal = jax.random.normal(k2, (D,), dtype=jnp.float32)
    ref = _sparse_reward_xla(ee_pos, ee_goal, weight, sigma)

    cost = cart_sparse_reward(ee_pos, ee_goal, weight=weight, sigma=sigma,
                              force_pallas=True)
    cost = jax.block_until_ready(cost)
    assert cost.shape == (B, H)
    assert jnp.allclose(cost, ref, rtol=1e-5, atol=1e-4)

    cost_small = cart_sparse_reward(ee_pos, ee_goal, weight=weight, sigma=sigma)
    cost_small = jax.block_until_ready(cost_small)
    assert jnp.allclose(cost_small, ref, rtol=1e-6, atol=1e-5)

    # Case 2: non-multiple-of-128 point count -> multi-step "parallel" grid
    # with a partially out-of-bounds boundary block (no padding pass).
    B2, H2 = 16, 500
    ee_pos2 = jax.random.normal(k3, (B2, H2, D), dtype=jnp.float32)
    cost2 = cart_sparse_reward(ee_pos2, ee_goal, weight=weight, sigma=sigma,
                               block_rows=8, force_pallas=True)
    cost2 = jax.block_until_ready(cost2)
    ref2 = _sparse_reward_xla(ee_pos2, ee_goal, weight, sigma)
    assert cost2.shape == (B2, H2)
    assert jnp.allclose(cost2, ref2, rtol=1e-5, atol=1e-4)

    # Case 3: bf16 coordinate-planar (SoA) input fed straight to the kernel
    # entrypoint (in-kernel upcast; halves HBM read traffic).
    N3 = 2048
    ee_pos3 = jax.random.normal(k4, (N3, D), dtype=jnp.float32)
    planar_bf16 = aos_to_planar(ee_pos3).astype(jnp.bfloat16)
    cost3 = cart_sparse_reward_planar(planar_bf16, ee_goal, weight=weight,
                                      sigma=sigma)
    cost3 = jax.block_until_ready(cost3)
    ref3 = _sparse_reward_xla(ee_pos3.astype(jnp.bfloat16), ee_goal,
                              weight, sigma)
    assert cost3.shape == (N3,)
    assert jnp.allclose(cost3, ref3, rtol=1e-5, atol=1e-4)

    print("KERNEL_OK")
</pallas_src>

<mosaic_0001>
module attributes {stable_mosaic.version = 11 : i64} {
  func.func @_sparse_reward_kernel(%arg0: i32, %arg1: memref<3xf32, #tpu.memory_space<smem>>, %arg2: memref<2xf32, #tpu.memory_space<smem>>, %arg3: memref<3x1x128xf32, #tpu.memory_space<vmem>>, %arg4: memref<1x128xf32, #tpu.memory_space<vmem>>) attributes {dimension_semantics = [#tpu.dimension_semantics<parallel>], iteration_bounds = array<i64: 1>, scalar_prefetch = 0 : i64, scratch_operands = 0 : i64, tpu.core_type = #tpu.core_type<tc>, window_params = [{transform_indices = @transform_0, window_bounds = array<i64: 3>}, {transform_indices = @transform_1, window_bounds = array<i64: 2>}, {transform_indices = @transform_2, window_bounds = array<i64: 3, 1, 128>}, {transform_indices = @transform_3, window_bounds = array<i64: 1, 128>}]} {
    %c0 = arith.constant 0 : index
    %0 = memref.load %arg2[%c0] : memref<2xf32, #tpu.memory_space<smem>>
    %c1 = arith.constant 1 : index
    %1 = memref.load %arg2[%c1] : memref<2xf32, #tpu.memory_space<smem>>
    %c0_0 = arith.constant 0 : index
    %c0_1 = arith.constant 0 : index
    %c0_2 = arith.constant 0 : index
    %2 = vector.load %arg3[%c0_0, %c0_1, %c0_2] : memref<3x1x128xf32, #tpu.memory_space<vmem>>, vector<1x1x128xf32>
    %3 = vector.shape_cast %2 : vector<1x1x128xf32> to vector<1x128xf32>
    %c0_3 = arith.constant 0 : index
    %4 = memref.load %arg1[%c0_3] : memref<3xf32, #tpu.memory_space<smem>>
    %5 = vector.broadcast %4 : f32 to vector<1x128xf32>
    %6 = arith.subf %3, %5 : vector<1x128xf32>
    %7 = arith.mulf %6, %6 : vector<1x128xf32>
    %c1_4 = arith.constant 1 : index
    %c0_5 = arith.constant 0 : index
    %c0_6 = arith.constant 0 : index
    %8 = vector.load %arg3[%c1_4, %c0_5, %c0_6] : memref<3x1x128xf32, #tpu.memory_space<vmem>>, vector<1x1x128xf32>
    %9 = vector.shape_cast %8 : vector<1x1x128xf32> to vector<1x128xf32>
    %c1_7 = arith.constant 1 : index
    %10 = memref.load %arg1[%c1_7] : memref<3xf32, #tpu.memory_space<smem>>
    %11 = vector.broadcast %10 : f32 to vector<1x128xf32>
    %12 = arith.subf %9, %11 : vector<1x128xf32>
    %13 = arith.mulf %12, %12 : vector<1x128xf32>
    %14 = arith.addf %7, %13 : vector<1x128xf32>
    %c2 = arith.constant 2 : index
    %c0_8 = arith.constant 0 : index
    %c0_9 = arith.constant 0 : index
    %15 = vector.load %arg3[%c2, %c0_8, %c0_9] : memref<3x1x128xf32, #tpu.memory_space<vmem>>, vector<1x1x128xf32>
    %16 = vector.shape_cast %15 : vector<1x1x128xf32> to vector<1x128xf32>
    %c2_10 = arith.constant 2 : index
    %17 = memref.load %arg1[%c2_10] : memref<3xf32, #tpu.memory_space<smem>>
    %18 = vector.broadcast %17 : f32 to vector<1x128xf32>
    %19 = arith.subf %16, %18 : vector<1x128xf32>
    %20 = arith.mulf %19, %19 : vector<1x128xf32>
    %21 = arith.addf %14, %20 : vector<1x128xf32>
    %22 = vector.broadcast %1 : f32 to vector<1x128xf32>
    %23 = arith.mulf %21, %22 : vector<1x128xf32>
    %24 = math.exp %23 : vector<1x128xf32>
    %cst = arith.constant 1.000000e+00 : f32
    %25 = vector.broadcast %cst : f32 to vector<1x128xf32>
    %26 = arith.subf %25, %24 : vector<1x128xf32>
    %27 = vector.broadcast %0 : f32 to vector<1x128xf32>
    %28 = arith.mulf %27, %26 : vector<1x128xf32>
    %c0_11 = arith.constant 0 : index
    %c0_12 = arith.constant 0 : index
    %29 = vector.load %arg4[%c0_11, %c0_12] : memref<1x128xf32, #tpu.memory_space<vmem>>, vector<1x128xf32>
    tpu.vector_store %arg4[%c0_11, %c0_12], %28 {strides = array<i32>} : memref<1x128xf32, #tpu.memory_space<vmem>>, vector<1x128xf32>,
    return
  }
  func.func @transform_0(%arg0: i32) -> i32 {
    %c0_i32 = arith.constant 0 : i32
    %c0_i32_0 = arith.constant 0 : i32
    return %c0_i32 : i32
  }
  func.func @transform_1(%arg0: i32) -> i32 {
    %c0_i32 = arith.constant 0 : i32
    %c0_i32_0 = arith.constant 0 : i32
    return %c0_i32 : i32
  }
  func.func @transform_2(%arg0: i32) -> (i32, i32, i32) {
    %c0_i32 = arith.constant 0 : i32
    %c0_i32_0 = arith.constant 0 : i32
    %c0_i32_1 = arith.constant 0 : i32
    return %c0_i32, %arg0, %c0_i32_0 : i32, i32, i32
  }
  func.func @transform_3(%arg0: i32) -> (i32, i32) {
    %c0_i32 = arith.constant 0 : i32
    %c0_i32_0 = arith.constant 0 : i32
    return %arg0, %c0_i32 : i32, i32
  }
}

</mosaic_0001>

<llo_original>
// kernel: tpu_custom_call.1
$region0: #{tpu_custom_call.1}
  #allocation0 [shape = 'u32[]', space=smem, size = 0x4, offset = 0x4, fixed_abs, tag = 'smem constant byte address 0x4 - core index']
  #allocation1 [shape = 'u32[144,128]{1,0:T(1,128)}', space=vmem, size = 0x12000, scoped, tag = 'internal scratch']
  %s0 = inlined_call_operand.hbm [shape: f32[3], index: 0, kind: input, shape index: {}]
  %s1 = inlined_call_operand.hbm [shape: f32[2], index: 1, kind: input, shape index: {}]
  %s2 = inlined_call_operand.vmem [shape: f32[3,1,128], index: 2, kind: input, shape index: {}]
  %s3 = inlined_call_operand.hbm [shape: f32[1,128], index: 3, kind: output, shape index: {}]
  %s4 = sld [smem:[#allocation0]]
  $region30: #{tpu_custom_call.1} parent=0
    _
  %s6 = ssub.s32 1, %s4
  %s7 = scalar_select 0, %s6, %s4
  $region1: #{tpu_custom_call.1} parent=0
    #allocation2 [shape = 'u8[512]{0}', space=smem, size = 0x200, scoped, tag = 'input window, operand 0, single buffered']
    #allocation3 [shape = 's32[1]{0}', space=sflag, size = 0x4, scoped, tag = 'scoped memory for tpu_custom_call.1']
    #allocation4 [shape = 's32[1]{0}', space=sflag, size = 0x4, scoped, tag = 'scoped memory for tpu_custom_call.1']
    #allocation5 [shape = 'u8[512]{0}', space=smem, size = 0x200, scoped, tag = 'input window, operand 1, single buffered']
    #allocation6 [shape = 's32[1]{0}', space=sflag, size = 0x4, scoped, tag = 'scoped memory for tpu_custom_call.1']
    #allocation7 [shape = 'u8[512]{0}', space=vmem, size = 0x400, scoped, tag = 'output window, operand 0, single buffered']
    %8 = vsyncpa [#allocation4], 0
    %9 = vsyncpa [#allocation6], 0
    %10 = vsyncpa [#allocation3], 0
    // Predicated region
    $region2: #{tpu_custom_call.1} parent=1 // pred_check
      _
    $region3: #{tpu_custom_call.1} parent=1 // pred_check_branch
      %12 = sbr.rel (0) target = $region5
    $region4: #{tpu_custom_call.1} parent=1 // pred_region
      %s14 = ssub.s32 16, 16
      %15 = vsyncadd [#allocation4], %s14
      %18 = dma.hbm_to_smem %s0, 16, [#allocation2], [#allocation4]
    $region5: #{tpu_custom_call.1} parent=1 // pred_fallthru
      _
    // Predicated region
    $region6: #{tpu_custom_call.1} parent=1 // pred_check
      _
    $region7: #{tpu_custom_call.1} parent=1 // pred_check_branch
      %20 = sbr.rel (0) target = $region9
    $region8: #{tpu_custom_call.1} parent=1 // pred_region
      %s22 = ssub.s32 16, 16
      %23 = vsyncadd [#allocation6], %s22
      %26 = dma.hbm_to_smem %s1, 16, [#allocation5], [#allocation6]
    $region9: #{tpu_custom_call.1} parent=1 // pred_fallthru
      _
    // Predicated region
    $region10: #{tpu_custom_call.1} parent=1 // pred_check
      _
    $region11: #{tpu_custom_call.1} parent=1 // pred_check_branch
      %28 = sbr.rel (0) target = $region13
    $region12: #{tpu_custom_call.1} parent=1 // pred_region
      _
    $region13: #{tpu_custom_call.1} parent=1 // pred_fallthru
      _
    // Predicated region
    $region14: #{tpu_custom_call.1} parent=1 // pred_check
      _
    $region15: #{tpu_custom_call.1} parent=1 // pred_check_branch
      %30 = sbr.rel (0) target = $region17
    $region16: #{tpu_custom_call.1} parent=1 // pred_region
      %31 = dma.done [#allocation4], 16
    $region17: #{tpu_custom_call.1} parent=1 // pred_fallthru
      _
    // Predicated region
    $region18: #{tpu_custom_call.1} parent=1 // pred_check
      _
    $region19: #{tpu_custom_call.1} parent=1 // pred_check_branch
      %33 = sbr.rel (0) target = $region21
    $region20: #{tpu_custom_call.1} parent=1 // pred_region
      %34 = dma.done [#allocation6], 16
    $region21: #{tpu_custom_call.1} parent=1 // pred_fallthru
      _
    %35 = sfence
    %s36 = sld [smem:[#allocation5]]
    %s37 = sld [smem:[#allocation5 + $0x1]]
    %v38 = vld [vmem:[%s2] sm:$0x1]
    %s39 = sld [smem:[#allocation2]]
    %v40 = vstv %s39
    %v41 = vsub.f32 %v38, %v40
    %v42 = vmul.f32 %v41, %v41
    %s43 = scalar_lea.vmem %s2, 1
    %v44 = vld [vmem:[%s43] sm:$0x1]
    %s45 = sld [smem:[#allocation2 + $0x1]]
    %v46 = vstv %s45
    %v47 = vsub.f32 %v44, %v46
    %v48 = vmul.f32 %v47, %v47
    %v49 = vadd.f32 %v42, %v48
    %s50 = scalar_lea.vmem %s2, 2
    %v51 = vld [vmem:[%s50] sm:$0x1]
    %s52 = sld [smem:[#allocation2 + $0x2]]
    %v53 = vstv %s52
    %v54 = vsub.f32 %v51, %v53
    %v55 = vmul.f32 %v54, %v54
    %v56 = vadd.f32 %v49, %v55
    %v57 = vstv %s37
    %v58 = vmul.f32 %v56, %v57
    %v59 = vmul.f32 %v58, 1.442695
    %v60 = vpow.pop %v59
    %v61 = vsub.f32 1.0, %v60
    %v62 = vstv %s36
    %v63 = vmul.f32 %v62, %v61
    %64 = vst [vmem:[#allocation7] sm:$0x1] %v63
    // Predicated region
    $region22: #{tpu_custom_call.1} parent=1 // pred_check
      _
    $region23: #{tpu_custom_call.1} parent=1 // pred_check_branch
      %66 = sbr.rel (0) target = $region25
    $region24: #{tpu_custom_call.1} parent=1 // pred_region
      %s68 = ssub.s32 16, 16
      %69 = vsyncadd [#allocation3], %s68
      %s71 = sshll.u32 [#allocation7], 4
      %s72 = int_to_ptr.vmem [resolvable:$true] %s71
      %74 = dma.vmem_to_hbm [thread:$0]  %s72, 16, %s3, [#allocation3]
    $region25: #{tpu_custom_call.1} parent=1 // pred_fallthru
      _
    // Predicated region
    $region26: #{tpu_custom_call.1} parent=1 // pred_check
      _
    $region27: #{tpu_custom_call.1} parent=1 // pred_check_branch
      %76 = sbr.rel (0) target = $region29
    $region28: #{tpu_custom_call.1} parent=1 // pred_region
      %77 = dma.done [#allocation3], 16
    $region29: #{tpu_custom_call.1} parent=1 // pred_fallthru
      _
    %78 = vsyncpa [#allocation3], 1
    %79 = vsyncpa [#allocation4], 1
    %80 = vsyncpa [#allocation6], 1

</llo_original>
